<compile_context>
chip_gen: v7x
topology: tpu7x:2x2x1
jax: 0.10.0
libtpu: 0.0.40
codegen_flags: <defaults>
</compile_context>

<pallas_src>
import itertools

import jax
import jax.numpy as jnp
import numpy as np
from jax.experimental import pallas as pl
from jax.experimental.pallas import tpu as pltpu


# ---------------------------------------------------------------------------
# Pallas kernel: fused Relation MLP (ReLU -> Linear -> ReLU -> Linear)
# ---------------------------------------------------------------------------
def _relation_mlp_kernel(x_ref, w1_ref, b1_ref, w2_ref, b2_ref, o_ref):
    x = jnp.maximum(x_ref[...], 0.0)                                   # ReLU (VPU)
    h = jnp.dot(x, w1_ref[...], preferred_element_type=jnp.float32)    # Linear 1 (MXU)
    h = jnp.maximum(h + b1_ref[...], 0.0)                              # bias + ReLU (f32)
    h = h.astype(w2_ref.dtype)
    y = jnp.dot(h, w2_ref[...], preferred_element_type=jnp.float32)    # Linear 2 (MXU)
    o_ref[...] = (y + b2_ref[...]).astype(o_ref.dtype)                 # lane-dense store


def _default_tile_rows():
    """Generation-dependent row tile: v5e MXU is 4x128^2, v6e/v7x are 2x256^2."""
    try:
        kind = jax.devices()[0].device_kind.lower()
    except Exception:
        return 256
    return 256 if "v5" in kind else 512


def relation_mlp(x2d, w1, b1, w2p, b2p, *, tile_rows=None, compute_dtype=jnp.float32):
    """Fused ReLU->Linear->ReLU->Linear over rows of x2d, tiled along the row axis.

    w2p / b2p must already be zero-padded so their output dim is a multiple of 128
    (lane-dense output stores).  Returns float32 of shape (rows, padded_out).
    """
    r, d_in = x2d.shape
    d_h = w1.shape[1]
    d_outp = w2p.shape[1]
    assert d_h % 128 == 0 and d_outp % 128 == 0

    if tile_rows is None:
        tile_rows = _default_tile_rows()
    tr = min(tile_rows, r)                   # full-dim block when r is small
    if tr < r:
        tr = max(8, (tr // 8) * 8)           # tiled blocks must be sublane aligned

    xc = x2d.astype(compute_dtype)
    w1c = w1.astype(compute_dtype)
    w2c = w2p.astype(compute_dtype)
    b1f = b1.reshape(1, d_h).astype(jnp.float32)
    b2f = b2p.reshape(1, d_outp).astype(jnp.float32)

    flops = 2 * r * (d_in * d_h + d_h * d_outp)
    bytes_accessed = (
        xc.size * xc.dtype.itemsize + w1c.size * w1c.dtype.itemsize
        + w2c.size * w2c.dtype.itemsize + b1f.size * 4 + b2f.size * 4
        + r * d_outp * 4)

    return pl.pallas_call(
        _relation_mlp_kernel,
        out_shape=jax.ShapeDtypeStruct((r, d_outp), jnp.float32),
        grid=(pl.cdiv(r, tr),),              # no host-side pad / slice of activations
        in_specs=[
            pl.BlockSpec((tr, d_in), lambda i: (i, 0)),    # row tile of activations
            pl.BlockSpec((d_in, d_h), lambda i: (0, 0)),   # full W1 (grid-invariant)
            pl.BlockSpec((1, d_h), lambda i: (0, 0)),      # b1
            pl.BlockSpec((d_h, d_outp), lambda i: (0, 0)), # full W2 (grid-invariant)
            pl.BlockSpec((1, d_outp), lambda i: (0, 0)),   # b2
        ],
        out_specs=pl.BlockSpec((tr, d_outp), lambda i: (i, 0)),
        compiler_params=pltpu.CompilerParams(dimension_semantics=("parallel",)),
        cost_estimate=pl.CostEstimate(flops=flops, transcendentals=0,
                                      bytes_accessed=bytes_accessed),
    )(xc, w1c, b1f, w2c, b2f)


def _relation_mlp_ref(x2d, w1, b1, w2p, b2p, *, tile_rows=None, compute_dtype=None):
    """Pure-JAX f32 reference for the fused kernel (correctness check)."""
    h = jnp.maximum(jnp.maximum(x2d, 0.0) @ w1 + b1, 0.0)
    return h @ w2p + b2p


# ---------------------------------------------------------------------------
# Deterministic parameter init (PyTorch nn.Linear-style uniform bounds).
# ---------------------------------------------------------------------------
def _linear_params(key, fan_in, fan_out):
    k1, k2 = jax.random.split(key)
    bound = 1.0 / float(np.sqrt(fan_in))
    w = jax.random.uniform(k1, (fan_in, fan_out), jnp.float32, -bound, bound)
    b = jax.random.uniform(k2, (fan_out,), jnp.float32, -bound, bound)
    return w, b


def _round_up(x, m):
    return ((x + m - 1) // m) * m


def init_multiscale_relation(key, num_input, in_features, out_features,
                             bottleneck_dim=512, num_relations=3):
    scales = list(range(num_input, 1, -1))
    relations_scales = [list(itertools.combinations(range(num_input), s)) for s in scales]
    subsample_scales = [min(num_relations, len(rs)) for rs in relations_scales]
    d_out_pad = _round_up(out_features, 128)         # lane-dense kernel output
    keys = jax.random.split(key, len(scales))
    relations = []
    for k, scale in zip(keys, scales):
        k1, k2 = jax.random.split(k)
        w1, b1 = _linear_params(k1, scale * in_features, bottleneck_dim)
        w2, b2 = _linear_params(k2, bottleneck_dim, out_features)
        relations.append(dict(
            scale=scale, w1=w1, b1=b1,
            w2p=jnp.pad(w2, ((0, 0), (0, d_out_pad - out_features))),
            b2p=jnp.pad(b2, (0, d_out_pad - out_features))))
    return dict(num_input=num_input, in_features=in_features,
                out_features=out_features, out_features_pad=d_out_pad,
                scales=scales, relations_scales=relations_scales,
                subsample_scales=subsample_scales, relations=relations)


def multiscale_relation_forward(x, params, *, seed=0, use_kernel=True,
                                tile_rows=None, compute_dtype=jnp.float32):
    """MultiScaleRelation.forward.  x: (B, num_input, in_features) -> (B, 1, out_features)."""
    # TODO(synk): the torch module subsamples frame combinations with np.random.choice at
    # every forward (host-side, non-traceable); we mirror it with a fixed-seed NumPy RNG so
    # the Pallas and reference paths see identical combinations.
    rng = np.random.default_rng(seed)
    B = x.shape[0]
    x = x.reshape(B, params["num_input"], params["in_features"])
    mlp = relation_mlp if use_kernel else _relation_mlp_ref

    total = jnp.zeros((B, params["out_features_pad"]), jnp.float32)
    for s_idx, scale in enumerate(params["scales"]):
        combos = params["relations_scales"][s_idx]
        n_sel = params["subsample_scales"][s_idx]
        idx = rng.choice(len(combos), size=n_sel, replace=False)
        sel = np.asarray([combos[i] for i in idx], dtype=np.int32)     # (n_sel, scale)
        rel = params["relations"][s_idx]
        # Gather all selected combinations and batch them into ONE tall matmul:
        # (B, n_sel, scale, f) -> (B*n_sel, scale*f); single pallas_call per scale.
        rows = x[:, sel, :].reshape(B * n_sel, scale * params["in_features"])
        y = mlp(rows, rel["w1"], rel["b1"], rel["w2p"], rel["b2p"],
                tile_rows=tile_rows, compute_dtype=compute_dtype)
        total = total + y.reshape(B, n_sel, -1).sum(axis=1)            # torch.stack(...).sum(0)
    out = total[:, :params["out_features"]]                            # drop lane padding once
    return out.reshape(B, 1, params["out_features"])


if __name__ == "__main__":
    key = jax.random.PRNGKey(0)
    B, num_input, in_features, out_features = 4, 4, 64, 32
    bottleneck_dim = 128

    kp, kx = jax.random.split(key)
    params = init_multiscale_relation(kp, num_input, in_features, out_features,
                                      bottleneck_dim=bottleneck_dim, num_relations=3)
    x = jax.random.normal(kx, (B, num_input, in_features), dtype=jnp.float32)

    out = multiscale_relation_forward(x, params)                       # Pallas, f32
    out = jax.block_until_ready(out)
    assert out.shape == (B, 1, out_features), out.shape

    ref = multiscale_relation_forward(x, params, use_kernel=False)     # pure-JAX reference
    np.testing.assert_allclose(np.asarray(out), np.asarray(ref), rtol=1e-5, atol=1e-5)

    # bf16 compute path (native MXU dtype on v6e/v7x); f32 accumulation inside the kernel.
    out_bf16 = multiscale_relation_forward(x, params, compute_dtype=jnp.bfloat16)
    out_bf16 = jax.block_until_ready(out_bf16)
    np.testing.assert_allclose(np.asarray(out_bf16), np.asarray(ref), rtol=5e-2, atol=5e-2)

    print("KERNEL_OK")
</pallas_src>

<mosaic_0001>
module attributes {stable_mosaic.version = 11 : i64} {
  func.func @_relation_mlp_kernel(%arg0: i32, %arg1: memref<4x256xf32, #tpu.memory_space<vmem>>, %arg2: memref<256x128xf32, #tpu.memory_space<vmem>>, %arg3: memref<1x128xf32, #tpu.memory_space<vmem>>, %arg4: memref<128x128xf32, #tpu.memory_space<vmem>>, %arg5: memref<1x128xf32, #tpu.memory_space<vmem>>, %arg6: memref<4x128xf32, #tpu.memory_space<vmem>>) attributes {dimension_semantics = [#tpu.dimension_semantics<parallel>], iteration_bounds = array<i64: 1>, scalar_prefetch = 0 : i64, scratch_operands = 0 : i64, tpu.core_type = #tpu.core_type<tc>, window_params = [{transform_indices = @transform_0, window_bounds = array<i64: 4, 256>}, {pipeline_mode = #tpu.pipeline_mode<synchronous>, transform_indices = @transform_1, window_bounds = array<i64: 256, 128>}, {pipeline_mode = #tpu.pipeline_mode<synchronous>, transform_indices = @transform_2, window_bounds = array<i64: 1, 128>}, {pipeline_mode = #tpu.pipeline_mode<synchronous>, transform_indices = @transform_3, window_bounds = array<i64: 128, 128>}, {pipeline_mode = #tpu.pipeline_mode<synchronous>, transform_indices = @transform_4, window_bounds = array<i64: 1, 128>}, {transform_indices = @transform_5, window_bounds = array<i64: 4, 128>}]} {
    %c0 = arith.constant 0 : index
    %c0_0 = arith.constant 0 : index
    %0 = vector.load %arg1[%c0, %c0_0] : memref<4x256xf32, #tpu.memory_space<vmem>>, vector<4x256xf32>
    %cst = arith.constant 0.000000e+00 : f32
    %1 = vector.broadcast %cst : f32 to vector<4x256xf32>
    %2 = arith.maximumf %0, %1 : vector<4x256xf32>
    %c0_1 = arith.constant 0 : index
    %c0_2 = arith.constant 0 : index
    %3 = vector.load %arg2[%c0_1, %c0_2] : memref<256x128xf32, #tpu.memory_space<vmem>>, vector<256x128xf32>
    %cst_3 = arith.constant dense<0.000000e+00> : vector<4x128xf32>
    %4 = tpu.matmul %2, %3, %cst_3 {dimension_numbers = #tpu.dot_dimension_numbers<[1], [0], [0], [1], [0, 0, 1, 1], [], []>} : vector<4x256xf32>, vector<256x128xf32>, vector<4x128xf32> -> vector<4x128xf32>
    %c0_4 = arith.constant 0 : index
    %c0_5 = arith.constant 0 : index
    %5 = vector.load %arg3[%c0_4, %c0_5] : memref<1x128xf32, #tpu.memory_space<vmem>>, vector<1x128xf32>
    %6 = vector.broadcast %5 : vector<1x128xf32> to vector<4x128xf32>
    %7 = arith.addf %4, %6 : vector<4x128xf32>
    %cst_6 = arith.constant 0.000000e+00 : f32
    %8 = vector.broadcast %cst_6 : f32 to vector<4x128xf32>
    %9 = arith.maximumf %7, %8 : vector<4x128xf32>
    %c0_7 = arith.constant 0 : index
    %c0_8 = arith.constant 0 : index
    %10 = vector.load %arg4[%c0_7, %c0_8] : memref<128x128xf32, #tpu.memory_space<vmem>>, vector<128x128xf32>
    %cst_9 = arith.constant dense<0.000000e+00> : vector<4x128xf32>
    %11 = tpu.matmul %9, %10, %cst_9 {dimension_numbers = #tpu.dot_dimension_numbers<[1], [0], [0], [1], [0, 0, 1, 1], [], []>} : vector<4x128xf32>, vector<128x128xf32>, vector<4x128xf32> -> vector<4x128xf32>
    %c0_10 = arith.constant 0 : index
    %c0_11 = arith.constant 0 : index
    %12 = vector.load %arg5[%c0_10, %c0_11] : memref<1x128xf32, #tpu.memory_space<vmem>>, vector<1x128xf32>
    %13 = vector.broadcast %12 : vector<1x128xf32> to vector<4x128xf32>
    %14 = arith.addf %11, %13 : vector<4x128xf32>
    %c0_12 = arith.constant 0 : index
    %c0_13 = arith.constant 0 : index
    %15 = vector.load %arg6[%c0_12, %c0_13] : memref<4x128xf32, #tpu.memory_space<vmem>>, vector<4x128xf32>
    tpu.vector_store %arg6[%c0_12, %c0_13], %14 {strides = array<i32>} : memref<4x128xf32, #tpu.memory_space<vmem>>, vector<4x128xf32>,
    return
  }
  func.func @transform_0(%arg0: i32) -> (i32, i32) {
    %c0_i32 = arith.constant 0 : i32
    %c0_i32_0 = arith.constant 0 : i32
    return %arg0, %c0_i32 : i32, i32
  }
  func.func @transform_1(%arg0: i32) -> (i32, i32) {
    %c0_i32 = arith.constant 0 : i32
    %c0_i32_0 = arith.constant 0 : i32
    %c0_i32_1 = arith.constant 0 : i32
    return %c0_i32, %c0_i32_0 : i32, i32
  }
  func.func @transform_2(%arg0: i32) -> (i32, i32) {
    %c0_i32 = arith.constant 0 : i32
    %c0_i32_0 = arith.constant 0 : i32
    %c0_i32_1 = arith.constant 0 : i32
    return %c0_i32, %c0_i32_0 : i32, i32
  }
  func.func @transform_3(%arg0: i32) -> (i32, i32) {
    %c0_i32 = arith.constant 0 : i32
    %c0_i32_0 = arith.constant 0 : i32
    %c0_i32_1 = arith.constant 0 : i32
    return %c0_i32, %c0_i32_0 : i32, i32
  }
  func.func @transform_4(%arg0: i32) -> (i32, i32) {
    %c0_i32 = arith.constant 0 : i32
    %c0_i32_0 = arith.constant 0 : i32
    %c0_i32_1 = arith.constant 0 : i32
    return %c0_i32, %c0_i32_0 : i32, i32
  }
  func.func @transform_5(%arg0: i32) -> (i32, i32) {
    %c0_i32 = arith.constant 0 : i32
    %c0_i32_0 = arith.constant 0 : i32
    return %arg0, %c0_i32 : i32, i32
  }
}

</mosaic_0001>

<llo_original>
// kernel: tpu_custom_call.1
$region0: #{tpu_custom_call.1}
  #allocation0 [shape = 'u32[]', space=smem, size = 0x4, offset = 0x4, fixed_abs, tag = 'smem constant byte address 0x4 - core index']
  #allocation1 [shape = 'u32[144,128]{1,0:T(1,128)}', space=vmem, size = 0x12000, scoped, tag = 'internal scratch']
  %s0 = inlined_call_operand.hbm [shape: f32[4,256], index: 0, kind: input, shape index: {}]
  %s1 = inlined_call_operand.hbm [shape: f32[256,128], index: 1, kind: input, shape index: {}]
  %s2 = inlined_call_operand.vmem [shape: f32[1,128], index: 2, kind: input, shape index: {}]
  %s3 = inlined_call_operand.hbm [shape: f32[128,128], index: 3, kind: input, shape index: {}]
  %s4 = inlined_call_operand.vmem [shape: f32[1,128], index: 4, kind: input, shape index: {}]
  %s5 = inlined_call_operand.hbm [shape: f32[4,128], index: 5, kind: output, shape index: {}]
  %s6 = sld [smem:[#allocation0]]
  $region42: #{tpu_custom_call.1} parent=0
    _
  %s8 = ssub.s32 1, %s6
  %s9 = scalar_select 0, %s8, %s6
  $region1: #{tpu_custom_call.1} parent=0
    #allocation2 [shape = 'u8[4096]{0}', space=vmem, size = 0x1000, scoped, tag = 'input window, operand 0, single buffered']
    #allocation3 [shape = 's32[1]{0}', space=sflag, size = 0x4, scoped, tag = 'scoped memory for tpu_custom_call.1']
    #allocation4 [shape = 's32[1]{0}', space=sflag, size = 0x4, scoped, tag = 'scoped memory for tpu_custom_call.1']
    #allocation5 [shape = 'u8[131072]{0}', space=vmem, size = 0x20000, scoped, tag = 'input window, operand 1, single buffered']
    #allocation6 [shape = 's32[1]{0}', space=sflag, size = 0x4, scoped, tag = 'scoped memory for tpu_custom_call.1']
    #allocation7 [shape = 'u8[65536]{0}', space=vmem, size = 0x10000, scoped, tag = 'input window, operand 3, single buffered']
    #allocation8 [shape = 'u8[2048]{0}', space=vmem, size = 0x800, scoped, tag = 'output window, operand 0, single buffered']
    %10 = vsyncpa [#allocation3], 0
    %11 = vsyncpa [#allocation6], 0
    %12 = vsyncpa [#allocation4], 0
    // Predicated region
    $region2: #{tpu_custom_call.1} parent=1 // pred_check
      _
    $region3: #{tpu_custom_call.1} parent=1 // pred_check_branch
      %14 = sbr.rel (0) target = $region5
    $region4: #{tpu_custom_call.1} parent=1 // pred_region
      %s16 = ssub.s32 128, 128
      %17 = vsyncadd [#allocation3], %s16
      %s19 = sshll.u32 [#allocation2], 4
      %s20 = int_to_ptr.vmem [resolvable:$true] %s19
      %22 = dma.hbm_to_vmem [thread:$0]  %s0, 128, %s20, [#allocation3]
    $region5: #{tpu_custom_call.1} parent=1 // pred_fallthru
      _
    // Predicated region
    $region6: #{tpu_custom_call.1} parent=1 // pred_check
      _
    $region7: #{tpu_custom_call.1} parent=1 // pred_check_branch
      %24 = sbr.rel (0) target = $region9
    $region8: #{tpu_custom_call.1} parent=1 // pred_region
      %s26 = ssub.s32 4096, 4096
      %27 = vsyncadd [#allocation6], %s26
      %s28 = sshll.u32 [#allocation5], 4
      %s29 = int_to_ptr.vmem [resolvable:$true] %s28
      %34 = dma.hbm_to_vmem [thread:$0]  %s1, 4096, %s29, [#allocation6], 128, 128, 8
    $region9: #{tpu_custom_call.1} parent=1 // pred_fallthru
      _
    // Predicated region
    $region10: #{tpu_custom_call.1} parent=1 // pred_check
      _
    $region11: #{tpu_custom_call.1} parent=1 // pred_check_branch
      %36 = sbr.rel (0) target = $region13
    $region12: #{tpu_custom_call.1} parent=1 // pred_region
      _
    $region13: #{tpu_custom_call.1} parent=1 // pred_fallthru
      _
    // Predicated region
    $region14: #{tpu_custom_call.1} parent=1 // pred_check
      _
    $region15: #{tpu_custom_call.1} parent=1 // pred_check_branch
      %38 = sbr.rel (0) target = $region17
    $region16: #{tpu_custom_call.1} parent=1 // pred_region
      %s40 = ssub.s32 2048, 2048
      %41 = vsyncadd [#allocation6], %s40
      %s42 = sshll.u32 [#allocation7], 4
      %s43 = int_to_ptr.vmem [resolvable:$true] %s42
      %48 = dma.hbm_to_vmem [thread:$0]  %s3, 2048, %s43, [#allocation6], 128, 128, 8
    $region17: #{tpu_custom_call.1} parent=1 // pred_fallthru
      _
    // Predicated region
    $region18: #{tpu_custom_call.1} parent=1 // pred_check
      _
    $region19: #{tpu_custom_call.1} parent=1 // pred_check_branch
      %50 = sbr.rel (0) target = $region21
    $region20: #{tpu_custom_call.1} parent=1 // pred_region
      _
    $region21: #{tpu_custom_call.1} parent=1 // pred_fallthru
      _
    // Predicated region
    $region22: #{tpu_custom_call.1} parent=1 // pred_check
      _
    $region23: #{tpu_custom_call.1} parent=1 // pred_check_branch
      %52 = sbr.rel (0) target = $region25
    $region24: #{tpu_custom_call.1} parent=1 // pred_region
      %53 = dma.done [#allocation3], 128
    $region25: #{tpu_custom_call.1} parent=1 // pred_fallthru
      _
    // Predicated region
    $region26: #{tpu_custom_call.1} parent=1 // pred_check
      _
    $region27: #{tpu_custom_call.1} parent=1 // pred_check_branch
      %55 = sbr.rel (0) target = $region29
    $region28: #{tpu_custom_call.1} parent=1 // pred_region
      %56 = dma.done [#allocation6], 4096
    $region29: #{tpu_custom_call.1} parent=1 // pred_fallthru
      _
    // Predicated region
    $region30: #{tpu_custom_call.1} parent=1 // pred_check
      _
    $region31: #{tpu_custom_call.1} parent=1 // pred_check_branch
      %58 = sbr.rel (0) target = $region33
    $region32: #{tpu_custom_call.1} parent=1 // pred_region
      %59 = dma.done [#allocation6], 2048
    $region33: #{tpu_custom_call.1} parent=1 // pred_fallthru
      _
    %v60 = vld [vmem:[#allocation2] sm:$0xff]
    %v61 = vmax.f32 %v60, 0.0
    %v62 = vld [vmem:[#allocation5] sm:$0xff]
    %v63 = vld [vmem:[#allocation5 + $0x8] sm:$0xff]
    %v64 = vld [vmem:[#allocation5 + $0x10] sm:$0xff]
    %v65 = vld [vmem:[#allocation5 + $0x18] sm:$0xff]
    %v66 = vld [vmem:[#allocation5 + $0x20] sm:$0xff]
    %v67 = vld [vmem:[#allocation5 + $0x28] sm:$0xff]
    %v68 = vld [vmem:[#allocation5 + $0x30] sm:$0xff]
    %v69 = vld [vmem:[#allocation5 + $0x38] sm:$0xff]
    %v70 = vld [vmem:[#allocation5 + $0x40] sm:$0xff]
    %v71 = vld [vmem:[#allocation5 + $0x48] sm:$0xff]
    %v72 = vld [vmem:[#allocation5 + $0x50] sm:$0xff]
    %v73 = vld [vmem:[#allocation5 + $0x58] sm:$0xff]
    %v74 = vld [vmem:[#allocation5 + $0x60] sm:$0xff]
    %v75 = vld [vmem:[#allocation5 + $0x68] sm:$0xff]
    %v76 = vld [vmem:[#allocation5 + $0x70] sm:$0xff]
    %v77 = vld [vmem:[#allocation5 + $0x78] sm:$0xff]
    %v78 = vld [vmem:[#allocation5 + $0x80] sm:$0xff]
    %v79 = vld [vmem:[#allocation5 + $0x88] sm:$0xff]
    %v80 = vld [vmem:[#allocation5 + $0x90] sm:$0xff]
    %v81 = vld [vmem:[#allocation5 + $0x98] sm:$0xff]
    %v82 = vld [vmem:[#allocation5 + $0xa0] sm:$0xff]
    %v83 = vld [vmem:[#allocation5 + $0xa8] sm:$0xff]
    %v84 = vld [vmem:[#allocation5 + $0xb0] sm:$0xff]
    %v85 = vld [vmem:[#allocation5 + $0xb8] sm:$0xff]
    %v86 = vld [vmem:[#allocation5 + $0xc0] sm:$0xff]
    %v87 = vld [vmem:[#allocation5 + $0xc8] sm:$0xff]
    %v88 = vld [vmem:[#allocation5 + $0xd0] sm:$0xff]
    %v89 = vld [vmem:[#allocation5 + $0xd8] sm:$0xff]
    %v90 = vld [vmem:[#allocation5 + $0xe0] sm:$0xff]
    %v91 = vld [vmem:[#allocation5 + $0xe8] sm:$0xff]
    %v92 = vld [vmem:[#allocation5 + $0xf0] sm:$0xff]
    %v93 = vld [vmem:[#allocation5 + $0xf8] sm:$0xff]
    %v94 = vld [vmem:[%s2] sm:$0x1]
    %v96 = vlaneseq
    %v97 = vshrl.u32 %v96, 7
    %v98 = vsub.s32 0, %v97
    %v99 = vrot.slane %v94, %v98
    %v102 = vcombine.high %v61, %v61
    %104 = vmatprep.subr.mxu0 0.0
    %105 = vmatpush1.msra.mxu0 %v62
    %106 = vmatprep.subr.mxu0 0.0
    %107 = vmatpush1.msra.mxu0 %v63
    %108 = vmatprep.subr.mxu0 0.0
    %109 = vmatpush1.msra.mxu0 %v64
    %110 = vmatprep.subr.mxu0 0.0
    %111 = vmatpush1.msra.mxu0 %v65
    %112 = vmatprep.subr.mxu0 0.0
    %113 = vmatpush1.msra.mxu0 %v66
    %114 = vmatprep.subr.mxu0 0.0
    %115 = vmatpush1.msra.mxu0 %v67
    %116 = vmatprep.subr.mxu0 0.0
    %117 = vmatpush1.msra.mxu0 %v68
    %118 = vmatprep.subr.mxu0 0.0
    %119 = vmatpush1.msra.mxu0 %v69
    %120 = vmatprep.subr.mxu0 0.0
    %121 = vmatpush1.msra.mxu0 %v70
    %122 = vmatprep.subr.mxu0 0.0
    %123 = vmatpush1.msra.mxu0 %v71
    %124 = vmatprep.subr.mxu0 0.0
    %125 = vmatpush1.msra.mxu0 %v72
    %126 = vmatprep.subr.mxu0 0.0
    %127 = vmatpush1.msra.mxu0 %v73
    %128 = vmatprep.subr.mxu0 0.0
    %129 = vmatpush1.msra.mxu0 %v74
    %130 = vmatprep.subr.mxu0 0.0
    %131 = vmatpush1.msra.mxu0 %v75
    %132 = vmatprep.subr.mxu0 0.0
    %133 = vmatpush1.msra.mxu0 %v76
    %134 = vmatprep.subr.mxu0 0.0
    %135 = vmatpush1.msra.mxu0 %v77
    %136 = vmatprep.subr.mxu0 0.0
    %137 = vmatpush1.msra.mxu0 %v78
    %138 = vmatprep.subr.mxu0 0.0
    %139 = vmatpush1.msra.mxu0 %v79
    %140 = vmatprep.subr.mxu0 0.0
    %141 = vmatpush1.msra.mxu0 %v80
    %142 = vmatprep.subr.mxu0 0.0
    %143 = vmatpush1.msra.mxu0 %v81
    %144 = vmatprep.subr.mxu0 0.0
    %145 = vmatpush1.msra.mxu0 %v82
    %146 = vmatprep.subr.mxu0 0.0
    %147 = vmatpush1.msra.mxu0 %v83
    %148 = vmatprep.subr.mxu0 0.0
    %149 = vmatpush1.msra.mxu0 %v84
    %150 = vmatprep.subr.mxu0 0.0
    %151 = vmatpush1.msra.mxu0 %v85
    %152 = vmatprep.subr.mxu0 0.0
    %153 = vmatpush1.msra.mxu0 %v86
    %154 = vmatprep.subr.mxu0 0.0
    %155 = vmatpush1.msra.mxu0 %v87
    %156 = vmatprep.subr.mxu0 0.0
    %157 = vmatpush1.msra.mxu0 %v88
    %158 = vmatprep.subr.mxu0 0.0
    %159 = vmatpush1.msra.mxu0 %v89
    %160 = vmatprep.subr.mxu0 0.0
    %161 = vmatpush1.msra.mxu0 %v90
    %162 = vmatprep.subr.mxu0 0.0
    %163 = vmatpush1.msra.mxu0 %v91
    %164 = vmatprep.subr.mxu0 0.0
    %165 = vmatpush1.msra.mxu0 %v92
    %166 = vmatprep.subr.mxu0 0.0
    %167 = vmatpush1.msra.mxu0 %v93
    %168 = vmatprep.mubr.f32.mxu0 %v102
    %169 = vmatmul.mubr.f32.gmra.mrb[0].mxu0 %v61
    %v170 = vpop.f32.mrb[0].mxu0
    %v171 = vadd.f32 %v99, %v170
    %v172 = vpop.f32.mrb[0].mxu0
    %173 = vdwg.mxu0
    %v174 = vmax.f32 %v171, 0.0
    %v175 = vld [vmem:[#allocation7] sm:$0xff]
    %v176 = vld [vmem:[#allocation7 + $0x8] sm:$0xff]
    %v177 = vld [vmem:[#allocation7 + $0x10] sm:$0xff]
    %v178 = vld [vmem:[#allocation7 + $0x18] sm:$0xff]
    %v179 = vld [vmem:[#allocation7 + $0x20] sm:$0xff]
    %v180 = vld [vmem:[#allocation7 + $0x28] sm:$0xff]
    %v181 = vld [vmem:[#allocation7 + $0x30] sm:$0xff]
    %v182 = vld [vmem:[#allocation7 + $0x38] sm:$0xff]
    %v183 = vld [vmem:[#allocation7 + $0x40] sm:$0xff]
    %v184 = vld [vmem:[#allocation7 + $0x48] sm:$0xff]
    %v185 = vld [vmem:[#allocation7 + $0x50] sm:$0xff]
    %v186 = vld [vmem:[#allocation7 + $0x58] sm:$0xff]
    %v187 = vld [vmem:[#allocation7 + $0x60] sm:$0xff]
    %v188 = vld [vmem:[#allocation7 + $0x68] sm:$0xff]
    %v189 = vld [vmem:[#allocation7 + $0x70] sm:$0xff]
    %v190 = vld [vmem:[#allocation7 + $0x78] sm:$0xff]
    %v191 = vld [vmem:[%s4] sm:$0x1]
    %v193 = vlaneseq
    %v194 = vshrl.u32 %v193, 7
    %v195 = vsub.s32 0, %v194
    %v196 = vrot.slane %v191, %v195
    %198 = vmatprep.subr.mxu0 0.0
    %199 = vmatpush1.msra.mxu0 %v175
    %200 = vmatprep.subr.mxu0 0.0
    %201 = vmatpush1.msra.mxu0 %v176
    %202 = vmatprep.subr.mxu0 0.0
    %203 = vmatpush1.msra.mxu0 %v177
    %204 = vmatprep.subr.mxu0 0.0
    %205 = vmatpush1.msra.mxu0 %v178
    %206 = vmatprep.subr.mxu0 0.0
    %207 = vmatpush1.msra.mxu0 %v179
    %208 = vmatprep.subr.mxu0 0.0
    %209 = vmatpush1.msra.mxu0 %v180
    %210 = vmatprep.subr.mxu0 0.0
    %211 = vmatpush1.msra.mxu0 %v181
    %212 = vmatprep.subr.mxu0 0.0
    %213 = vmatpush1.msra.mxu0 %v182
    %214 = vmatprep.subr.mxu0 0.0
    %215 = vmatpush1.msra.mxu0 %v183
    %216 = vmatprep.subr.mxu0 0.0
    %217 = vmatpush1.msra.mxu0 %v184
    %218 = vmatprep.subr.mxu0 0.0
    %219 = vmatpush1.msra.mxu0 %v185
    %220 = vmatprep.subr.mxu0 0.0
    %221 = vmatpush1.msra.mxu0 %v186
    %222 = vmatprep.subr.mxu0 0.0
    %223 = vmatpush1.msra.mxu0 %v187
    %224 = vmatprep.subr.mxu0 0.0
    %225 = vmatpush1.msra.mxu0 %v188
    %226 = vmatprep.subr.mxu0 0.0
    %227 = vmatpush1.msra.mxu0 %v189
    %228 = vmatprep.subr.mxu0 0.0
    %229 = vmatpush1.msra.mxu0 %v190
    %230 = vmatprep.subr.mxu0 0.0
    %231 = vmatpush1.msra.mxu0 0.0
    %232 = vmatprep.subr.mxu0 0.0
    %233 = vmatpush1.msra.mxu0 0.0
    %234 = vmatprep.subr.mxu0 0.0
    %235 = vmatpush1.msra.mxu0 0.0
    %236 = vmatprep.subr.mxu0 0.0
    %237 = vmatpush1.msra.mxu0 0.0
    %238 = vmatprep.subr.mxu0 0.0
    %239 = vmatpush1.msra.mxu0 0.0
    %240 = vmatprep.subr.mxu0 0.0
    %241 = vmatpush1.msra.mxu0 0.0
    %242 = vmatprep.subr.mxu0 0.0
    %243 = vmatpush1.msra.mxu0 0.0
    %244 = vmatprep.subr.mxu0 0.0
    %245 = vmatpush1.msra.mxu0 0.0
    %246 = vmatprep.subr.mxu0 0.0
    %247 = vmatpush1.msra.mxu0 0.0
    %248 = vmatprep.subr.mxu0 0.0
    %249 = vmatpush1.msra.mxu0 0.0
    %250 = vmatprep.subr.mxu0 0.0
    %251 = vmatpush1.msra.mxu0 0.0
    %252 = vmatprep.subr.mxu0 0.0
    %253 = vmatpush1.msra.mxu0 0.0
    %254 = vmatprep.subr.mxu0 0.0
    %255 = vmatpush1.msra.mxu0 0.0
    %256 = vmatprep.subr.mxu0 0.0
    %257 = vmatpush1.msra.mxu0 0.0
    %258 = vmatprep.subr.mxu0 0.0
    %259 = vmatpush1.msra.mxu0 0.0
    %260 = vmatprep.subr.mxu0 0.0
    %261 = vmatpush1.msra.mxu0 0.0
    %262 = vmatprep.mubr.f32.mxu0 0.0
    %263 = vmatmul.mubr.f32.gmra.mrb[0].mxu0 %v174
    %v264 = vpop.f32.mrb[0].mxu0
    %v265 = vadd.f32 %v196, %v264
    %v266 = vpop.f32.mrb[0].mxu0
    %267 = vdwg.mxu0
    %268 = vst [vmem:[#allocation8] sm:$0xf] %v265
    // Predicated region
    $region34: #{tpu_custom_call.1} parent=1 // pred_check
      _
    $region35: #{tpu_custom_call.1} parent=1 // pred_check_branch
      %270 = sbr.rel (0) target = $region37
    $region36: #{tpu_custom_call.1} parent=1 // pred_region
      %s272 = ssub.s32 64, 64
      %273 = vsyncadd [#allocation4], %s272
      %s275 = sshll.u32 [#allocation8], 4
      %s276 = int_to_ptr.vmem [resolvable:$true] %s275
      %278 = dma.vmem_to_hbm [thread:$0]  %s276, 64, %s5, [#allocation4]
    $region37: #{tpu_custom_call.1} parent=1 // pred_fallthru
      _
    // Predicated region
    $region38: #{tpu_custom_call.1} parent=1 // pred_check
      _
    $region39: #{tpu_custom_call.1} parent=1 // pred_check_branch
      %280 = sbr.rel (0) target = $region41
    $region40: #{tpu_custom_call.1} parent=1 // pred_region
      %281 = dma.done [#allocation4], 64
    $region41: #{tpu_custom_call.1} parent=1 // pred_fallthru
      _
    %282 = vsyncpa [#allocation3], 1
    %283 = vsyncpa [#allocation6], 1
    %284 = vsyncpa [#allocation4], 1

</llo_original>
